<compile_context>
chip_gen: v7x
topology: tpu7x:2x2x1
jax: 0.10.0
libtpu: 0.0.40
codegen_flags: <defaults>
</compile_context>

<pallas_src>
import functools

import jax
import jax.numpy as jnp
from jax.experimental import pallas as pl
from jax.experimental.pallas import tpu as pltpu


def _round_up(x, m):
    return ((x + m - 1) // m) * m


# ----------------------------- Pallas kernels ------------------------------ #
def _cbr_kernel_single(p_ref, w_ref, shift_ref, o_ref, *, add_relu):
    # Whole K in one tile: GEMM + epilogue, no accumulator scratch.
    y = jnp.dot(p_ref[...], w_ref[...], preferred_element_type=jnp.float32)
    y = y + shift_ref[...]
    if add_relu:
        y = jnp.maximum(y, 0.0)
    o_ref[...] = y.astype(o_ref.dtype)


def _cbr_kernel_ktiled(p_ref, w_ref, shift_ref, o_ref, acc_ref, *, add_relu):
    # p_ref:     (TM, TK)  bf16 im2col patch tile
    # w_ref:     (TK, TN)  bf16 conv weight with the BN scale pre-folded in
    # shift_ref: (1,  TN)  f32  folded bias / BN shift
    # o_ref:     (TM, TN)  output tile (lane-dense: TN multiple of 128)
    # acc_ref:   (TM, TN)  f32 accumulator scratch, resident across the K axis
    k = pl.program_id(2)

    @pl.when(k == 0)
    def _():
        acc_ref[...] = jnp.zeros_like(acc_ref)

    acc_ref[...] += jnp.dot(p_ref[...], w_ref[...],
                            preferred_element_type=jnp.float32)

    @pl.when(k == pl.num_programs(2) - 1)
    def _():
        y = acc_ref[...] + shift_ref[...]
        if add_relu:
            y = jnp.maximum(y, 0.0)
        o_ref[...] = y.astype(o_ref.dtype)


# ------------------------------- im2col ----------------------------------- #
def _im2col(x, kernel_size, stride, padding, dilation):
    """x: (N, C, H, W) -> patches (N*Ho*Wo, C*kh*kw), K ordered (C, kh, kw)."""
    N, C, H, W = x.shape
    kh = kw = kernel_size
    Ho = (H + 2 * padding - dilation * (kh - 1) - 1) // stride + 1
    Wo = (W + 2 * padding - dilation * (kw - 1) - 1) // stride + 1

    if kh == 1 and kw == 1 and padding == 0:
        # Fast path: 1x1 conv is just a (strided) NHWC reshape.
        p = x[:, :, ::stride, ::stride].transpose(0, 2, 3, 1)
        return p.reshape(N * Ho * Wo, C), Ho, Wo

    xp = jnp.pad(x, ((0, 0), (0, 0), (padding, padding), (padding, padding)))
    cols = []
    for i in range(kh):
        for j in range(kw):
            hi = i * dilation
            wj = j * dilation
            patch = xp[:, :, hi:hi + stride * Ho:stride, wj:wj + stride * Wo:stride]
            cols.append(patch)  # (N, C, Ho, Wo)
    # (kh*kw, N, C, Ho, Wo) -> (N, Ho, Wo, C, kh*kw);  K ordering (C, kh, kw)
    # matches weight.reshape(Cout, Cin*kh*kw).
    p = jnp.stack(cols, axis=0).transpose(1, 3, 4, 2, 0)
    return p.reshape(N * Ho * Wo, C * kh * kw), Ho, Wo


# ------------------------------ tiling picks ------------------------------- #
def _pick_tm(M, TK, TN, out_itemsize):
    """Largest row tile that fits a ~24 MiB per-step VMEM budget."""
    budget = 24 * 1024 * 1024
    for tm in (2048, 1024, 512, 256, 128, 64, 32, 16):
        step = (2 * tm * TK * 2        # patches (bf16, double-buffered)
                + 2 * TK * TN * 2      # weights (bf16)
                + 2 * TN * 4           # shift   (f32)
                + 2 * tm * TN * out_itemsize   # output
                + tm * TN * 4)         # f32 accumulator scratch
        if step <= budget:
            return max(16, min(tm, _round_up(M, 16)))
    return 16


# ------------------------------- wrapper ----------------------------------- #
def conv_bn_relu(x, weight, bias, gamma, beta, running_mean, running_var,
                 *, stride=1, padding=0, dilation=1, eps=1e-5,
                 add_relu=True, use_batchnorm=True):
    """Forward of ConvBnRelu.  x: (N, C_in, H, W) NCHW float32.  Returns NCHW."""
    N, Cin, H, W = x.shape
    Cout, _, kh, kw = weight.shape

    # bf16 before im2col: halves HBM traffic of the materialized patch array.
    patches, Ho, Wo = _im2col(x.astype(jnp.bfloat16), kh, stride, padding,
                              dilation)                              # (M, K)
    M, K = patches.shape

    # ---- tiling / padding choices (lane-dense output, K-tiled GEMM) ----
    K_pad = _round_up(K, 128)
    TK = 512 if K_pad % 512 == 0 else (256 if K_pad % 256 == 0 else 128)
    Cout_pad = _round_up(Cout, 128)
    TN = 256 if Cout_pad % 256 == 0 else 128  # 256 feeds the v6e/v7x wide MXU
    out_itemsize = jnp.dtype(x.dtype).itemsize
    TM = _pick_tm(M, TK, TN, out_itemsize)
    M_pad = _round_up(M, TM)

    # ---- fold conv bias + eval-mode BN into the weights / one shift row ----
    if use_batchnorm:
        bn_scale = gamma / jnp.sqrt(running_var + eps)               # (Cout,)
        shift = (bias - running_mean) * bn_scale + beta
    else:
        bn_scale = jnp.ones((Cout,), jnp.float32)
        shift = bias
    w_mat = weight.reshape(Cout, Cin * kh * kw).T * bn_scale[None, :]   # (K, Cout)
    w_mat = jnp.pad(w_mat, ((0, K_pad - K), (0, Cout_pad - Cout))).astype(jnp.bfloat16)
    shift = jnp.pad(shift.astype(jnp.float32),
                    (0, Cout_pad - Cout)).reshape(1, Cout_pad)

    patches = jnp.pad(patches, ((0, M_pad - M), (0, K_pad - K)))     # bf16

    nk = K_pad // TK
    grid = (M_pad // TM, Cout_pad // TN, nk)

    # Explicit scoped-VMEM budget: double-buffered blocks + the accumulator,
    # with headroom, capped to stay under v7x's 64 MiB physical VMEM.
    step_bytes = (2 * TM * TK * 2
                  + 2 * TK * TN * 2
                  + 2 * TN * 4
                  + 2 * TM * TN * out_itemsize
                  + (TM * TN * 4 if nk > 1 else 0))
    vmem_limit = int(min(max(2 * step_bytes, 32 * 1024 * 1024),
                         56 * 1024 * 1024))

    if nk == 1:
        kernel = functools.partial(_cbr_kernel_single, add_relu=add_relu)
        scratch_shapes = []
    else:
        kernel = functools.partial(_cbr_kernel_ktiled, add_relu=add_relu)
        scratch_shapes = [pltpu.VMEM((TM, TN), jnp.float32)]

    out = pl.pallas_call(
        kernel,
        out_shape=jax.ShapeDtypeStruct((M_pad, Cout_pad), x.dtype),
        grid_spec=pltpu.PrefetchScalarGridSpec(
            num_scalar_prefetch=0,
            grid=grid,
            in_specs=[
                pl.BlockSpec((TM, TK), lambda i, j, k: (i, k)),
                pl.BlockSpec((TK, TN), lambda i, j, k: (k, j)),
                pl.BlockSpec((1, TN), lambda i, j, k: (0, j)),
            ],
            out_specs=pl.BlockSpec((TM, TN), lambda i, j, k: (i, j)),
            scratch_shapes=scratch_shapes,
        ),
        compiler_params=pltpu.CompilerParams(
            dimension_semantics=("parallel", "parallel", "arbitrary"),
            vmem_limit_bytes=vmem_limit),
    )(patches, w_mat, shift)

    out = out[:M, :Cout]                       # drop M / Cout padding
    # (N*Ho*Wo, Cout) -> NCHW to match the PyTorch module's output layout.
    # TODO(synk): emit NHWC if the consumer allows it to save this transpose.
    return out.reshape(N, Ho, Wo, Cout).transpose(0, 3, 1, 2)


# ------------------------------- reference --------------------------------- #
def _reference(x, weight, bias, gamma, beta, rm, rv, *, stride, padding,
               dilation, eps, add_relu, use_batchnorm):
    y = jax.lax.conv_general_dilated(
        x, weight, window_strides=(stride, stride),
        padding=((padding, padding), (padding, padding)),
        rhs_dilation=(dilation, dilation),
        dimension_numbers=("NCHW", "OIHW", "NCHW"))
    y = y + bias[None, :, None, None]
    if use_batchnorm:
        y = (y - rm[None, :, None, None]) / jnp.sqrt(rv[None, :, None, None] + eps)
        y = y * gamma[None, :, None, None] + beta[None, :, None, None]
    if add_relu:
        y = jnp.maximum(y, 0.0)
    return y


if __name__ == "__main__":
    # Module config: ConvBnRelu(in=4, out=8, kernel_size=3, stride=1, padding=1)
    N, Cin, H, W = 2, 4, 16, 16
    Cout, ksize, stride, padding, dilation = 8, 3, 1, 1, 1

    key = jax.random.PRNGKey(0)
    kx, kw, kb = jax.random.split(key, 3)
    x = jax.random.normal(kx, (N, Cin, H, W), jnp.float32)
    weight = jax.random.normal(kw, (Cout, Cin, ksize, ksize), jnp.float32) * 0.1
    bias = jax.random.normal(kb, (Cout,), jnp.float32) * 0.1
    # BatchNorm2d parameters at PyTorch init values (eval mode).
    gamma = jnp.ones((Cout,), jnp.float32)
    beta = jnp.zeros((Cout,), jnp.float32)
    running_mean = jnp.zeros((Cout,), jnp.float32)
    running_var = jnp.ones((Cout,), jnp.float32)

    out = conv_bn_relu(x, weight, bias, gamma, beta, running_mean, running_var,
                       stride=stride, padding=padding, dilation=dilation,
                       add_relu=True, use_batchnorm=True)
    out = jax.block_until_ready(out)

    ref = _reference(x, weight, bias, gamma, beta, running_mean, running_var,
                     stride=stride, padding=padding, dilation=dilation,
                     eps=1e-5, add_relu=True, use_batchnorm=True)
    assert out.shape == (N, Cout, H, W)
    # bf16 operands with f32 accumulation -> relative error ~1e-3 at these
    # magnitudes; tolerance chosen accordingly.
    assert jnp.allclose(out, ref, atol=2e-2, rtol=2e-2)
    print("KERNEL_OK")
</pallas_src>

<mosaic_0001>
module attributes {stable_mosaic.version = 11 : i64} {
  func.func @_cbr_kernel_single(%arg0: i32, %arg1: i32, %arg2: i32, %arg3: memref<512x128xbf16, #tpu.memory_space<vmem>>, %arg4: memref<128x128xbf16, #tpu.memory_space<vmem>>, %arg5: memref<1x128xf32, #tpu.memory_space<vmem>>, %arg6: memref<512x128xf32, #tpu.memory_space<vmem>>) attributes {dimension_semantics = [#tpu.dimension_semantics<parallel>, #tpu.dimension_semantics<parallel>, #tpu.dimension_semantics<arbitrary>], iteration_bounds = array<i64: 1, 1, 1>, scalar_prefetch = 0 : i64, scratch_operands = 0 : i64, tpu.core_type = #tpu.core_type<tc>, window_params = [{transform_indices = @transform_0, window_bounds = array<i64: 512, 128>}, {transform_indices = @transform_1, window_bounds = array<i64: 128, 128>}, {transform_indices = @transform_2, window_bounds = array<i64: 1, 128>}, {transform_indices = @transform_3, window_bounds = array<i64: 512, 128>}]} {
    %c0 = arith.constant 0 : index
    %c0_0 = arith.constant 0 : index
    %0 = vector.load %arg3[%c0, %c0_0] : memref<512x128xbf16, #tpu.memory_space<vmem>>, vector<512x128xbf16>
    %c0_1 = arith.constant 0 : index
    %c0_2 = arith.constant 0 : index
    %1 = vector.load %arg4[%c0_1, %c0_2] : memref<128x128xbf16, #tpu.memory_space<vmem>>, vector<128x128xbf16>
    %cst = arith.constant dense<0.000000e+00> : vector<512x128xf32>
    %2 = tpu.matmul %0, %1, %cst {dimension_numbers = #tpu.dot_dimension_numbers<[1], [0], [0], [1], [0, 0, 1, 1], [], []>} : vector<512x128xbf16>, vector<128x128xbf16>, vector<512x128xf32> -> vector<512x128xf32>
    %c0_3 = arith.constant 0 : index
    %c0_4 = arith.constant 0 : index
    %3 = vector.load %arg5[%c0_3, %c0_4] : memref<1x128xf32, #tpu.memory_space<vmem>>, vector<1x128xf32>
    %4 = vector.broadcast %3 : vector<1x128xf32> to vector<512x128xf32>
    %5 = arith.addf %2, %4 : vector<512x128xf32>
    %cst_5 = arith.constant 0.000000e+00 : f32
    %6 = vector.broadcast %cst_5 : f32 to vector<512x128xf32>
    %7 = arith.maximumf %5, %6 : vector<512x128xf32>
    %c0_6 = arith.constant 0 : index
    %c0_7 = arith.constant 0 : index
    %8 = vector.load %arg6[%c0_6, %c0_7] : memref<512x128xf32, #tpu.memory_space<vmem>>, vector<512x128xf32>
    tpu.vector_store %arg6[%c0_6, %c0_7], %7 {strides = array<i32>} : memref<512x128xf32, #tpu.memory_space<vmem>>, vector<512x128xf32>,
    return
  }
  func.func @transform_0(%arg0: i32, %arg1: i32, %arg2: i32) -> (i32, i32) {
    %c0_i32 = arith.constant 0 : i32
    return %arg0, %arg2 : i32, i32
  }
  func.func @transform_1(%arg0: i32, %arg1: i32, %arg2: i32) -> (i32, i32) {
    %c0_i32 = arith.constant 0 : i32
    return %arg2, %arg1 : i32, i32
  }
  func.func @transform_2(%arg0: i32, %arg1: i32, %arg2: i32) -> (i32, i32) {
    %c0_i32 = arith.constant 0 : i32
    %c0_i32_0 = arith.constant 0 : i32
    return %c0_i32, %arg1 : i32, i32
  }
  func.func @transform_3(%arg0: i32, %arg1: i32, %arg2: i32) -> (i32, i32) {
    %c0_i32 = arith.constant 0 : i32
    return %arg0, %arg1 : i32, i32
  }
}

</mosaic_0001>

<llo_original>
// kernel: tpu_custom_call.1
$region0: #{tpu_custom_call.1}
  #allocation0 [shape = 'u32[]', space=smem, size = 0x4, offset = 0x4, fixed_abs, tag = 'smem constant byte address 0x4 - core index']
  #allocation1 [shape = 'u32[144,128]{1,0:T(1,128)}', space=vmem, size = 0x12000, scoped, tag = 'internal scratch']
  %s0 = inlined_call_operand.hbm [shape: bf16[512,128], index: 0, kind: input, shape index: {}]
  %s1 = inlined_call_operand.hbm [shape: bf16[128,128], index: 1, kind: input, shape index: {}]
  %s2 = inlined_call_operand.vmem [shape: f32[1,128], index: 2, kind: input, shape index: {}]
  %s3 = inlined_call_operand.hbm [shape: f32[512,128], index: 3, kind: output, shape index: {}]
  %s4 = sld [smem:[#allocation0]]
  $region30: #{tpu_custom_call.1} parent=0
    _
  %s6 = ssub.s32 1, %s4
  %s7 = scalar_select 0, %s6, %s4
  $region1: #{tpu_custom_call.1} parent=0
    #allocation2 [shape = 'u8[131072]{0}', space=vmem, size = 0x20000, scoped, tag = 'input window, operand 0, single buffered']
    #allocation3 [shape = 's32[1]{0}', space=sflag, size = 0x4, scoped, tag = 'scoped memory for tpu_custom_call.1']
    #allocation4 [shape = 's32[1]{0}', space=sflag, size = 0x4, scoped, tag = 'scoped memory for tpu_custom_call.1']
    #allocation5 [shape = 'u8[32768]{0}', space=vmem, size = 0x8000, scoped, tag = 'input window, operand 1, single buffered']
    #allocation6 [shape = 's32[1]{0}', space=sflag, size = 0x4, scoped, tag = 'scoped memory for tpu_custom_call.1']
    #allocation7 [shape = 'u8[262144]{0}', space=vmem, size = 0x40000, scoped, tag = 'output window, operand 0, single buffered']
    %8 = vsyncpa [#allocation3], 0
    %9 = vsyncpa [#allocation6], 0
    %10 = vsyncpa [#allocation4], 0
    // Predicated region
    $region2: #{tpu_custom_call.1} parent=1 // pred_check
      _
    $region3: #{tpu_custom_call.1} parent=1 // pred_check_branch
      %12 = sbr.rel (0) target = $region5
    $region4: #{tpu_custom_call.1} parent=1 // pred_region
      %s14 = ssub.s32 4096, 4096
      %15 = vsyncadd [#allocation3], %s14
      %s16 = sshll.u32 [#allocation2], 4
      %s17 = int_to_ptr.vmem [resolvable:$true] %s16
      %22 = dma.hbm_to_vmem [thread:$0]  %s0, 4096, %s17, [#allocation3], 64, 64, 4
    $region5: #{tpu_custom_call.1} parent=1 // pred_fallthru
      _
    // Predicated region
    $region6: #{tpu_custom_call.1} parent=1 // pred_check
      _
    $region7: #{tpu_custom_call.1} parent=1 // pred_check_branch
      %24 = sbr.rel (0) target = $region9
    $region8: #{tpu_custom_call.1} parent=1 // pred_region
      %s26 = ssub.s32 1024, 1024
      %27 = vsyncadd [#allocation6], %s26
      %s28 = sshll.u32 [#allocation5], 4
      %s29 = int_to_ptr.vmem [resolvable:$true] %s28
      %34 = dma.hbm_to_vmem [thread:$0]  %s1, 1024, %s29, [#allocation6], 64, 64, 4
    $region9: #{tpu_custom_call.1} parent=1 // pred_fallthru
      _
    // Predicated region
    $region10: #{tpu_custom_call.1} parent=1 // pred_check
      _
    $region11: #{tpu_custom_call.1} parent=1 // pred_check_branch
      %36 = sbr.rel (0) target = $region13
    $region12: #{tpu_custom_call.1} parent=1 // pred_region
      _
    $region13: #{tpu_custom_call.1} parent=1 // pred_fallthru
      _
    // Predicated region
    $region14: #{tpu_custom_call.1} parent=1 // pred_check
      _
    $region15: #{tpu_custom_call.1} parent=1 // pred_check_branch
      %38 = sbr.rel (0) target = $region17
    $region16: #{tpu_custom_call.1} parent=1 // pred_region
      %39 = dma.done [#allocation3], 4096
    $region17: #{tpu_custom_call.1} parent=1 // pred_fallthru
      _
    // Predicated region
    $region18: #{tpu_custom_call.1} parent=1 // pred_check
      _
    $region19: #{tpu_custom_call.1} parent=1 // pred_check_branch
      %41 = sbr.rel (0) target = $region21
    $region20: #{tpu_custom_call.1} parent=1 // pred_region
      %42 = dma.done [#allocation6], 1024
    $region21: #{tpu_custom_call.1} parent=1 // pred_fallthru
      _
    %v44 = vld [vmem:[#allocation2] sm:$0xf]
    %v45 = vld [vmem:[#allocation2 + $0x4] sm:$0xf]
    %v46 = vld [vmem:[#allocation2 + $0x8] sm:$0xf]
    %v47 = vld [vmem:[#allocation2 + $0xc] sm:$0xf]
    %v48 = vld [vmem:[#allocation2 + $0x10] sm:$0xf]
    %v49 = vld [vmem:[#allocation2 + $0x14] sm:$0xf]
    %v50 = vld [vmem:[#allocation2 + $0x18] sm:$0xf]
    %v51 = vld [vmem:[#allocation2 + $0x1c] sm:$0xf]
    %v52 = vld [vmem:[#allocation2 + $0x20] sm:$0xf]
    %v53 = vld [vmem:[#allocation2 + $0x24] sm:$0xf]
    %v54 = vld [vmem:[#allocation2 + $0x28] sm:$0xf]
    %v55 = vld [vmem:[#allocation2 + $0x2c] sm:$0xf]
    %v56 = vld [vmem:[#allocation2 + $0x30] sm:$0xf]
    %v57 = vld [vmem:[#allocation2 + $0x34] sm:$0xf]
    %v58 = vld [vmem:[#allocation2 + $0x38] sm:$0xf]
    %v59 = vld [vmem:[#allocation2 + $0x3c] sm:$0xf]
    %v60 = vld [vmem:[#allocation2 + $0x40] sm:$0xf]
    %v61 = vld [vmem:[#allocation2 + $0x44] sm:$0xf]
    %v62 = vld [vmem:[#allocation2 + $0x48] sm:$0xf]
    %v63 = vld [vmem:[#allocation2 + $0x4c] sm:$0xf]
    %v64 = vld [vmem:[#allocation2 + $0x50] sm:$0xf]
    %v65 = vld [vmem:[#allocation2 + $0x54] sm:$0xf]
    %v66 = vld [vmem:[#allocation2 + $0x58] sm:$0xf]
    %v67 = vld [vmem:[#allocation2 + $0x5c] sm:$0xf]
    %v68 = vld [vmem:[#allocation2 + $0x60] sm:$0xf]
    %v69 = vld [vmem:[#allocation2 + $0x64] sm:$0xf]
    %v70 = vld [vmem:[#allocation2 + $0x68] sm:$0xf]
    %v71 = vld [vmem:[#allocation2 + $0x6c] sm:$0xf]
    %v72 = vld [vmem:[#allocation2 + $0x70] sm:$0xf]
    %v73 = vld [vmem:[#allocation2 + $0x74] sm:$0xf]
    %v74 = vld [vmem:[#allocation2 + $0x78] sm:$0xf]
    %v75 = vld [vmem:[#allocation2 + $0x7c] sm:$0xf]
    %v76 = vld [vmem:[#allocation2 + $0x80] sm:$0xf]
    %v77 = vld [vmem:[#allocation2 + $0x84] sm:$0xf]
    %v78 = vld [vmem:[#allocation2 + $0x88] sm:$0xf]
    %v79 = vld [vmem:[#allocation2 + $0x8c] sm:$0xf]
    %v80 = vld [vmem:[#allocation2 + $0x90] sm:$0xf]
    %v81 = vld [vmem:[#allocation2 + $0x94] sm:$0xf]
    %v82 = vld [vmem:[#allocation2 + $0x98] sm:$0xf]
    %v83 = vld [vmem:[#allocation2 + $0x9c] sm:$0xf]
    %v84 = vld [vmem:[#allocation2 + $0xa0] sm:$0xf]
    %v85 = vld [vmem:[#allocation2 + $0xa4] sm:$0xf]
    %v86 = vld [vmem:[#allocation2 + $0xa8] sm:$0xf]
    %v87 = vld [vmem:[#allocation2 + $0xac] sm:$0xf]
    %v88 = vld [vmem:[#allocation2 + $0xb0] sm:$0xf]
    %v89 = vld [vmem:[#allocation2 + $0xb4] sm:$0xf]
    %v90 = vld [vmem:[#allocation2 + $0xb8] sm:$0xf]
    %v91 = vld [vmem:[#allocation2 + $0xbc] sm:$0xf]
    %v92 = vld [vmem:[#allocation2 + $0xc0] sm:$0xf]
    %v93 = vld [vmem:[#allocation2 + $0xc4] sm:$0xf]
    %v94 = vld [vmem:[#allocation2 + $0xc8] sm:$0xf]
    %v95 = vld [vmem:[#allocation2 + $0xcc] sm:$0xf]
    %v96 = vld [vmem:[#allocation2 + $0xd0] sm:$0xf]
    %v97 = vld [vmem:[#allocation2 + $0xd4] sm:$0xf]
    %v98 = vld [vmem:[#allocation2 + $0xd8] sm:$0xf]
    %v99 = vld [vmem:[#allocation2 + $0xdc] sm:$0xf]
    %v100 = vld [vmem:[#allocation2 + $0xe0] sm:$0xf]
    %v101 = vld [vmem:[#allocation2 + $0xe4] sm:$0xf]
    %v102 = vld [vmem:[#allocation2 + $0xe8] sm:$0xf]
    %v103 = vld [vmem:[#allocation2 + $0xec] sm:$0xf]
    %v104 = vld [vmem:[#allocation2 + $0xf0] sm:$0xf]
    %v105 = vld [vmem:[#allocation2 + $0xf4] sm:$0xf]
    %v106 = vld [vmem:[#allocation2 + $0xf8] sm:$0xf]
    %v107 = vld [vmem:[#allocation2 + $0xfc] sm:$0xf]
    %v108 = vld [vmem:[#allocation5] sm:$0xf]
    %v109 = vld [vmem:[#allocation5 + $0x4] sm:$0xf]
    %v110 = vld [vmem:[#allocation5 + $0x8] sm:$0xf]
    %v111 = vld [vmem:[#allocation5 + $0xc] sm:$0xf]
    %v112 = vld [vmem:[#allocation5 + $0x10] sm:$0xf]
    %v113 = vld [vmem:[#allocation5 + $0x14] sm:$0xf]
    %v114 = vld [vmem:[#allocation5 + $0x18] sm:$0xf]
    %v115 = vld [vmem:[#allocation5 + $0x1c] sm:$0xf]
    %v116 = vld [vmem:[#allocation5 + $0x20] sm:$0xf]
    %v117 = vld [vmem:[#allocation5 + $0x24] sm:$0xf]
    %v118 = vld [vmem:[#allocation5 + $0x28] sm:$0xf]
    %v119 = vld [vmem:[#allocation5 + $0x2c] sm:$0xf]
    %v120 = vld [vmem:[#allocation5 + $0x30] sm:$0xf]
    %v121 = vld [vmem:[#allocation5 + $0x34] sm:$0xf]
    %v122 = vld [vmem:[#allocation5 + $0x38] sm:$0xf]
    %v123 = vld [vmem:[#allocation5 + $0x3c] sm:$0xf]
    %v124 = vld [vmem:[%s2] sm:$0x1]
    %v126 = vlaneseq
    %v127 = vshrl.u32 %v126, 7
    %v128 = vsub.s32 0, %v127
    %v129 = vrot.slane %v124, %v128
    %v195 = vunpack.c.l.b16 %v44
    %v196 = vunpack.c.l.b16 %v45
    %v197 = vunpack.c.l.b16 %v46
    %v198 = vunpack.c.l.b16 %v47
    %v199 = vunpack.c.l.b16 %v48
    %v200 = vunpack.c.l.b16 %v49
    %v201 = vunpack.c.l.b16 %v50
    %v202 = vunpack.c.l.b16 %v51
    %v203 = vunpack.c.l.b16 %v52
    %v204 = vunpack.c.l.b16 %v53
    %v205 = vunpack.c.l.b16 %v54
    %v206 = vunpack.c.l.b16 %v55
    %v207 = vunpack.c.l.b16 %v56
    %v208 = vunpack.c.l.b16 %v57
    %v209 = vunpack.c.l.b16 %v58
    %v210 = vunpack.c.l.b16 %v59
    %v211 = vunpack.c.l.b16 %v60
    %v212 = vunpack.c.l.b16 %v61
    %v213 = vunpack.c.l.b16 %v62
    %v214 = vunpack.c.l.b16 %v63
    %v215 = vunpack.c.l.b16 %v64
    %v216 = vunpack.c.l.b16 %v65
    %v217 = vunpack.c.l.b16 %v66
    %v218 = vunpack.c.l.b16 %v67
    %v219 = vunpack.c.l.b16 %v68
    %v220 = vunpack.c.l.b16 %v69
    %v221 = vunpack.c.l.b16 %v70
    %v222 = vunpack.c.l.b16 %v71
    %v223 = vunpack.c.l.b16 %v72
    %v224 = vunpack.c.l.b16 %v73
    %v225 = vunpack.c.l.b16 %v74
    %v226 = vunpack.c.l.b16 %v75
    %v227 = vunpack.c.l.b16 %v76
    %v228 = vunpack.c.l.b16 %v77
    %v229 = vunpack.c.l.b16 %v78
    %v230 = vunpack.c.l.b16 %v79
    %v231 = vunpack.c.l.b16 %v80
    %v232 = vunpack.c.l.b16 %v81
    %v233 = vunpack.c.l.b16 %v82
    %v234 = vunpack.c.l.b16 %v83
    %v235 = vunpack.c.l.b16 %v84
    %v236 = vunpack.c.l.b16 %v85
    %v237 = vunpack.c.l.b16 %v86
    %v238 = vunpack.c.l.b16 %v87
    %v239 = vunpack.c.l.b16 %v88
    %v240 = vunpack.c.l.b16 %v89
    %v241 = vunpack.c.l.b16 %v90
    %v242 = vunpack.c.l.b16 %v91
    %v243 = vunpack.c.l.b16 %v92
    %v244 = vunpack.c.l.b16 %v93
    %v245 = vunpack.c.l.b16 %v94
    %v246 = vunpack.c.l.b16 %v95
    %v247 = vunpack.c.l.b16 %v96
    %v248 = vunpack.c.l.b16 %v97
    %v249 = vunpack.c.l.b16 %v98
    %v250 = vunpack.c.l.b16 %v99
    %v251 = vunpack.c.l.b16 %v100
    %v252 = vunpack.c.l.b16 %v101
    %v253 = vunpack.c.l.b16 %v102
    %v254 = vunpack.c.l.b16 %v103
    %v255 = vunpack.c.l.b16 %v104
    %v256 = vunpack.c.l.b16 %v105
    %v257 = vunpack.c.l.b16 %v106
    %v258 = vunpack.c.l.b16 %v107
    %v259 = vpack.c.b16 %v196, %v195
    %v260 = vpack.c.b16 %v198, %v197
    %v261 = vpack.c.b16 %v200, %v199
    %v262 = vpack.c.b16 %v202, %v201
    %v263 = vpack.c.b16 %v204, %v203
    %v264 = vpack.c.b16 %v206, %v205
    %v265 = vpack.c.b16 %v208, %v207
    %v266 = vpack.c.b16 %v210, %v209
    %v267 = vpack.c.b16 %v212, %v211
    %v268 = vpack.c.b16 %v214, %v213
    %v269 = vpack.c.b16 %v216, %v215
    %v270 = vpack.c.b16 %v218, %v217
    %v271 = vpack.c.b16 %v220, %v219
    %v272 = vpack.c.b16 %v222, %v221
    %v273 = vpack.c.b16 %v224, %v223
    %v274 = vpack.c.b16 %v226, %v225
    %v275 = vpack.c.b16 %v228, %v227
    %v276 = vpack.c.b16 %v230, %v229
    %v277 = vpack.c.b16 %v232, %v231
    %v278 = vpack.c.b16 %v234, %v233
    %v279 = vpack.c.b16 %v236, %v235
    %v280 = vpack.c.b16 %v238, %v237
    %v281 = vpack.c.b16 %v240, %v239
    %v282 = vpack.c.b16 %v242, %v241
    %v283 = vpack.c.b16 %v244, %v243
    %v284 = vpack.c.b16 %v246, %v245
    %v285 = vpack.c.b16 %v248, %v247
    %v286 = vpack.c.b16 %v250, %v249
    %v287 = vpack.c.b16 %v252, %v251
    %v288 = vpack.c.b16 %v254, %v253
    %v289 = vpack.c.b16 %v256, %v255
    %v290 = vpack.c.b16 %v258, %v257
    %v339 = vunpack.c.l.b16 %v108
    %v340 = vunpack.c.l.b16 %v109
    %v341 = vunpack.c.l.b16 %v110
    %v342 = vunpack.c.l.b16 %v111
    %v343 = vunpack.c.l.b16 %v112
    %v344 = vunpack.c.l.b16 %v113
    %v345 = vunpack.c.l.b16 %v114
    %v346 = vunpack.c.l.b16 %v115
    %v347 = vunpack.c.l.b16 %v116
    %v348 = vunpack.c.l.b16 %v117
    %v349 = vunpack.c.l.b16 %v118
    %v350 = vunpack.c.l.b16 %v119
    %v351 = vunpack.c.l.b16 %v120
    %v352 = vunpack.c.l.b16 %v121
    %v353 = vunpack.c.l.b16 %v122
    %v354 = vunpack.c.l.b16 %v123
    %v355 = vpack.c.b16 %v340, %v339
    %v356 = vpack.c.b16 %v342, %v341
    %v357 = vpack.c.b16 %v344, %v343
    %v358 = vpack.c.b16 %v346, %v345
    %v359 = vpack.c.b16 %v348, %v347
    %v360 = vpack.c.b16 %v350, %v349
    %v361 = vpack.c.b16 %v352, %v351
    %v362 = vpack.c.b16 %v354, %v353
    %371 = vmatprep.subr.bf16.mxu0 0
    %372 = vmatpush1.bf16.msra.mxu0 %v355
    %373 = vmatprep.subr.bf16.mxu0 0
    %374 = vmatpush1.bf16.msra.mxu0 %v356
    %375 = vmatprep.subr.bf16.mxu0 0
    %376 = vmatpush1.bf16.msra.mxu0 %v357
    %377 = vmatprep.subr.bf16.mxu0 0
    %378 = vmatpush1.bf16.msra.mxu0 %v358
    %379 = vmatprep.subr.bf16.mxu0 0
    %380 = vmatpush1.bf16.msra.mxu0 %v359
    %381 = vmatprep.subr.bf16.mxu0 0
    %382 = vmatpush1.bf16.msra.mxu0 %v360
    %383 = vmatprep.subr.bf16.mxu0 0
    %384 = vmatpush1.bf16.msra.mxu0 %v361
    %385 = vmatprep.subr.bf16.mxu0 0
    %386 = vmatpush1.bf16.msra.mxu0 %v362
    %387 = vmatprep.subr.bf16.mxu0 0
    %388 = vmatpush1.bf16.msra.mxu0 0
    %389 = vmatprep.subr.bf16.mxu0 0
    %390 = vmatpush1.bf16.msra.mxu0 0
    %391 = vmatprep.subr.bf16.mxu0 0
    %392 = vmatpush1.bf16.msra.mxu0 0
    %393 = vmatprep.subr.bf16.mxu0 0
    %394 = vmatpush1.bf16.msra.mxu0 0
    %395 = vmatprep.subr.bf16.mxu0 0
    %396 = vmatpush1.bf16.msra.mxu0 0
    %397 = vmatprep.subr.bf16.mxu0 0
    %398 = vmatpush1.bf16.msra.mxu0 0
    %399 = vmatprep.subr.bf16.mxu0 0
    %400 = vmatpush1.bf16.msra.mxu0 0
    %401 = vmatprep.subr.bf16.mxu0 0
    %402 = vmatpush1.bf16.msra.mxu0 0
    %403 = vmatprep.mubr.bf16.mxu0 0
    %404 = vmatmul.mubr.bf16.gmra.mrb[0].mxu0 %v259
    %v405 = vpop.f32.mrb[0].mxu0
    %v406 = vadd.f32 %v129, %v405
    %v407 = vpop.f32.mrb[0].mxu0
    %v408 = vpop.f32.mrb[0].mxu0
    %v409 = vadd.f32 %v129, %v408
    %v410 = vpop.f32.mrb[0].mxu0
    %411 = vmatprep.mubr.bf16.mxu0 0
    %412 = vmatmul.mubr.bf16.gmra.mrb[0].mxu0 %v260
    %v413 = vpop.f32.mrb[0].mxu0
    %v414 = vadd.f32 %v129, %v413
    %v415 = vpop.f32.mrb[0].mxu0
    %v416 = vpop.f32.mrb[0].mxu0
    %v417 = vadd.f32 %v129, %v416
    %v418 = vpop.f32.mrb[0].mxu0
    %419 = vmatprep.mubr.bf16.mxu0 0
    %420 = vmatmul.mubr.bf16.gmra.mrb[0].mxu0 %v261
    %v421 = vpop.f32.mrb[0].mxu0
    %v422 = vadd.f32 %v129, %v421
    %v423 = vpop.f32.mrb[0].mxu0
    %v424 = vpop.f32.mrb[0].mxu0
    %v425 = vadd.f32 %v129, %v424
    %v426 = vpop.f32.mrb[0].mxu0
    %427 = vmatprep.mubr.bf16.mxu0 0
    %428 = vmatmul.mubr.bf16.gmra.mrb[0].mxu0 %v262
    %v429 = vpop.f32.mrb[0].mxu0
    %v430 = vadd.f32 %v129, %v429
    %v431 = vpop.f32.mrb[0].mxu0
    %v432 = vpop.f32.mrb[0].mxu0
    %v433 = vadd.f32 %v129, %v432
    %v434 = vpop.f32.mrb[0].mxu0
    %435 = vmatprep.mubr.bf16.mxu0 0
    %436 = vmatmul.mubr.bf16.gmra.mrb[0].mxu0 %v263
    %v437 = vpop.f32.mrb[0].mxu0
    %v438 = vadd.f32 %v129, %v437
    %v439 = vpop.f32.mrb[0].mxu0
    %v440 = vpop.f32.mrb[0].mxu0
    %v441 = vadd.f32 %v129, %v440
    %v442 = vpop.f32.mrb[0].mxu0
    %443 = vmatprep.mubr.bf16.mxu0 0
    %444 = vmatmul.mubr.bf16.gmra.mrb[0].mxu0 %v264
    %v445 = vpop.f32.mrb[0].mxu0
    %v446 = vadd.f32 %v129, %v445
    %v447 = vpop.f32.mrb[0].mxu0
    %v448 = vpop.f32.mrb[0].mxu0
    %v449 = vadd.f32 %v129, %v448
    %v450 = vpop.f32.mrb[0].mxu0
    %451 = vmatprep.mubr.bf16.mxu0 0
    %452 = vmatmul.mubr.bf16.gmra.mrb[0].mxu0 %v265
    %v453 = vpop.f32.mrb[0].mxu0
    %v454 = vadd.f32 %v129, %v453
    %v455 = vpop.f32.mrb[0].mxu0
    %v456 = vpop.f32.mrb[0].mxu0
    %v457 = vadd.f32 %v129, %v456
    %v458 = vpop.f32.mrb[0].mxu0
    %459 = vmatprep.mubr.bf16.mxu0 0
    %460 = vmatmul.mubr.bf16.gmra.mrb[0].mxu0 %v266
    %v461 = vpop.f32.mrb[0].mxu0
    %v462 = vadd.f32 %v129, %v461
    %v463 = vpop.f32.mrb[0].mxu0
    %v464 = vpop.f32.mrb[0].mxu0
    %v465 = vadd.f32 %v129, %v464
    %v466 = vpop.f32.mrb[0].mxu0
    %467 = vmatprep.mubr.bf16.mxu0 0
    %468 = vmatmul.mubr.bf16.gmra.mrb[0].mxu0 %v267
    %v469 = vpop.f32.mrb[0].mxu0
    %v470 = vadd.f32 %v129, %v469
    %v471 = vpop.f32.mrb[0].mxu0
    %v472 = vpop.f32.mrb[0].mxu0
    %v473 = vadd.f32 %v129, %v472
    %v474 = vpop.f32.mrb[0].mxu0
    %475 = vmatprep.mubr.bf16.mxu0 0
    %476 = vmatmul.mubr.bf16.gmra.mrb[0].mxu0 %v268
    %v477 = vpop.f32.mrb[0].mxu0
    %v478 = vadd.f32 %v129, %v477
    %v479 = vpop.f32.mrb[0].mxu0
    %v480 = vpop.f32.mrb[0].mxu0
    %v481 = vadd.f32 %v129, %v480
    %v482 = vpop.f32.mrb[0].mxu0
    %483 = vmatprep.mubr.bf16.mxu0 0
    %484 = vmatmul.mubr.bf16.gmra.mrb[0].mxu0 %v269
    %v485 = vpop.f32.mrb[0].mxu0
    %v486 = vadd.f32 %v129, %v485
    %v487 = vpop.f32.mrb[0].mxu0
    %v488 = vpop.f32.mrb[0].mxu0
    %v489 = vadd.f32 %v129, %v488
    %v490 = vpop.f32.mrb[0].mxu0
    %491 = vmatprep.mubr.bf16.mxu0 0
    %492 = vmatmul.mubr.bf16.gmra.mrb[0].mxu0 %v270
    %v493 = vpop.f32.mrb[0].mxu0
    %v494 = vadd.f32 %v129, %v493
    %v495 = vpop.f32.mrb[0].mxu0
    %v496 = vpop.f32.mrb[0].mxu0
    %v497 = vadd.f32 %v129, %v496
    %v498 = vpop.f32.mrb[0].mxu0
    %499 = vmatprep.mubr.bf16.mxu0 0
    %500 = vmatmul.mubr.bf16.gmra.mrb[0].mxu0 %v271
    %v501 = vpop.f32.mrb[0].mxu0
    %v502 = vadd.f32 %v129, %v501
    %v503 = vpop.f32.mrb[0].mxu0
    %v504 = vpop.f32.mrb[0].mxu0
    %v505 = vadd.f32 %v129, %v504
    %v506 = vpop.f32.mrb[0].mxu0
    %507 = vmatprep.mubr.bf16.mxu0 0
    %508 = vmatmul.mubr.bf16.gmra.mrb[0].mxu0 %v272
    %v509 = vpop.f32.mrb[0].mxu0
    %v510 = vadd.f32 %v129, %v509
    %v511 = vpop.f32.mrb[0].mxu0
    %v512 = vpop.f32.mrb[0].mxu0
    %v513 = vadd.f32 %v129, %v512
    %v514 = vpop.f32.mrb[0].mxu0
    %515 = vmatprep.mubr.bf16.mxu0 0
    %516 = vmatmul.mubr.bf16.gmra.mrb[0].mxu0 %v273
    %v517 = vpop.f32.mrb[0].mxu0
    %v518 = vadd.f32 %v129, %v517
    %v519 = vpop.f32.mrb[0].mxu0
    %v520 = vpop.f32.mrb[0].mxu0
    %v521 = vadd.f32 %v129, %v520
    %v522 = vpop.f32.mrb[0].mxu0
    %523 = vmatprep.mubr.bf16.mxu0 0
    %524 = vmatmul.mubr.bf16.gmra.mrb[0].mxu0 %v274
    %v525 = vpop.f32.mrb[0].mxu0
    %v526 = vadd.f32 %v129, %v525
    %v527 = vpop.f32.mrb[0].mxu0
    %v528 = vpop.f32.mrb[0].mxu0
    %v529 = vadd.f32 %v129, %v528
    %v530 = vpop.f32.mrb[0].mxu0
    %531 = vmatprep.mubr.bf16.mxu0 0
    %532 = vmatmul.mubr.bf16.gmra.mrb[0].mxu0 %v275
    %v533 = vpop.f32.mrb[0].mxu0
    %v534 = vadd.f32 %v129, %v533
    %v535 = vpop.f32.mrb[0].mxu0
    %v536 = vpop.f32.mrb[0].mxu0
    %v537 = vadd.f32 %v129, %v536
    %v538 = vpop.f32.mrb[0].mxu0
    %539 = vmatprep.mubr.bf16.mxu0 0
    %540 = vmatmul.mubr.bf16.gmra.mrb[0].mxu0 %v276
    %v541 = vpop.f32.mrb[0].mxu0
    %v542 = vadd.f32 %v129, %v541
    %v543 = vpop.f32.mrb[0].mxu0
    %v544 = vpop.f32.mrb[0].mxu0
    %v545 = vadd.f32 %v129, %v544
    %v546 = vpop.f32.mrb[0].mxu0
    %547 = vmatprep.mubr.bf16.mxu0 0
    %548 = vmatmul.mubr.bf16.gmra.mrb[0].mxu0 %v277
    %v549 = vpop.f32.mrb[0].mxu0
    %v550 = vadd.f32 %v129, %v549
    %v551 = vpop.f32.mrb[0].mxu0
    %v552 = vpop.f32.mrb[0].mxu0
    %v553 = vadd.f32 %v129, %v552
    %v554 = vpop.f32.mrb[0].mxu0
    %555 = vmatprep.mubr.bf16.mxu0 0
    %556 = vmatmul.mubr.bf16.gmra.mrb[0].mxu0 %v278
    %v557 = vpop.f32.mrb[0].mxu0
    %v558 = vadd.f32 %v129, %v557
    %v559 = vpop.f32.mrb[0].mxu0
    %v560 = vpop.f32.mrb[0].mxu0
    %v561 = vadd.f32 %v129, %v560
    %v562 = vpop.f32.mrb[0].mxu0
    %563 = vmatprep.mubr.bf16.mxu0 0
    %564 = vmatmul.mubr.bf16.gmra.mrb[0].mxu0 %v279
    %v565 = vpop.f32.mrb[0].mxu0
    %v566 = vadd.f32 %v129, %v565
    %v567 = vpop.f32.mrb[0].mxu0
    %v568 = vpop.f32.mrb[0].mxu0
    %v569 = vadd.f32 %v129, %v568
    %v570 = vpop.f32.mrb[0].mxu0
    %571 = vmatprep.mubr.bf16.mxu0 0
    %572 = vmatmul.mubr.bf16.gmra.mrb[0].mxu0 %v280
    %v573 = vpop.f32.mrb[0].mxu0
    %v574 = vadd.f32 %v129, %v573
    %v575 = vpop.f32.mrb[0].mxu0
    %v576 = vpop.f32.mrb[0].mxu0
    %v577 = vadd.f32 %v129, %v576
    %v578 = vpop.f32.mrb[0].mxu0
    %579 = vmatprep.mubr.bf16.mxu0 0
    %580 = vmatmul.mubr.bf16.gmra.mrb[0].mxu0 %v281
    %v581 = vpop.f32.mrb[0].mxu0
    %v582 = vadd.f32 %v129, %v581
    %v583 = vpop.f32.mrb[0].mxu0
    %v584 = vpop.f32.mrb[0].mxu0
    %v585 = vadd.f32 %v129, %v584
    %v586 = vpop.f32.mrb[0].mxu0
    %587 = vmatprep.mubr.bf16.mxu0 0
    %588 = vmatmul.mubr.bf16.gmra.mrb[0].mxu0 %v282
    %v589 = vpop.f32.mrb[0].mxu0
    %v590 = vadd.f32 %v129, %v589
    %v591 = vpop.f32.mrb[0].mxu0
    %v592 = vpop.f32.mrb[0].mxu0
    %v593 = vadd.f32 %v129, %v592
    %v594 = vpop.f32.mrb[0].mxu0
    %595 = vmatprep.mubr.bf16.mxu0 0
    %596 = vmatmul.mubr.bf16.gmra.mrb[0].mxu0 %v283
    %v597 = vpop.f32.mrb[0].mxu0
    %v598 = vadd.f32 %v129, %v597
    %v599 = vpop.f32.mrb[0].mxu0
    %v600 = vpop.f32.mrb[0].mxu0
    %v601 = vadd.f32 %v129, %v600
    %v602 = vpop.f32.mrb[0].mxu0
    %603 = vmatprep.mubr.bf16.mxu0 0
    %604 = vmatmul.mubr.bf16.gmra.mrb[0].mxu0 %v284
    %v605 = vpop.f32.mrb[0].mxu0
    %v606 = vadd.f32 %v129, %v605
    %v607 = vpop.f32.mrb[0].mxu0
    %v608 = vpop.f32.mrb[0].mxu0
    %v609 = vadd.f32 %v129, %v608
    %v610 = vpop.f32.mrb[0].mxu0
    %611 = vmatprep.mubr.bf16.mxu0 0
    %612 = vmatmul.mubr.bf16.gmra.mrb[0].mxu0 %v285
    %v613 = vpop.f32.mrb[0].mxu0
    %v614 = vadd.f32 %v129, %v613
    %v615 = vpop.f32.mrb[0].mxu0
    %v616 = vpop.f32.mrb[0].mxu0
    %v617 = vadd.f32 %v129, %v616
    %v618 = vpop.f32.mrb[0].mxu0
    %619 = vmatprep.mubr.bf16.mxu0 0
    %620 = vmatmul.mubr.bf16.gmra.mrb[0].mxu0 %v286
    %v621 = vpop.f32.mrb[0].mxu0
    %v622 = vadd.f32 %v129, %v621
    %v623 = vpop.f32.mrb[0].mxu0
    %v624 = vpop.f32.mrb[0].mxu0
    %v625 = vadd.f32 %v129, %v624
    %v626 = vpop.f32.mrb[0].mxu0
    %627 = vmatprep.mubr.bf16.mxu0 0
    %628 = vmatmul.mubr.bf16.gmra.mrb[0].mxu0 %v287
    %v629 = vpop.f32.mrb[0].mxu0
    %v630 = vadd.f32 %v129, %v629
    %v631 = vpop.f32.mrb[0].mxu0
    %v632 = vpop.f32.mrb[0].mxu0
    %v633 = vadd.f32 %v129, %v632
    %v634 = vpop.f32.mrb[0].mxu0
    %635 = vmatprep.mubr.bf16.mxu0 0
    %636 = vmatmul.mubr.bf16.gmra.mrb[0].mxu0 %v288
    %v637 = vpop.f32.mrb[0].mxu0
    %v638 = vadd.f32 %v129, %v637
    %v639 = vpop.f32.mrb[0].mxu0
    %v640 = vpop.f32.mrb[0].mxu0
    %v641 = vadd.f32 %v129, %v640
    %v642 = vpop.f32.mrb[0].mxu0
    %643 = vmatprep.mubr.bf16.mxu0 0
    %644 = vmatmul.mubr.bf16.gmra.mrb[0].mxu0 %v289
    %v645 = vpop.f32.mrb[0].mxu0
    %v646 = vadd.f32 %v129, %v645
    %v647 = vpop.f32.mrb[0].mxu0
    %v648 = vpop.f32.mrb[0].mxu0
    %v649 = vadd.f32 %v129, %v648
    %v650 = vpop.f32.mrb[0].mxu0
    %651 = vmatprep.mubr.bf16.mxu0 0
    %652 = vmatmul.mubr.bf16.gmra.mrb[0].mxu0 %v290
    %v653 = vpop.f32.mrb[0].mxu0
    %v654 = vadd.f32 %v129, %v653
    %v655 = vpop.f32.mrb[0].mxu0
    %v656 = vpop.f32.mrb[0].mxu0
    %v657 = vadd.f32 %v129, %v656
    %v658 = vpop.f32.mrb[0].mxu0
    %659 = vdwg.mxu0
    %v660 = vmax.f32 %v406, 0.0
    %v661 = vmax.f32 %v409, 0.0
    %v662 = vmax.f32 %v414, 0.0
    %v663 = vmax.f32 %v417, 0.0
    %v664 = vmax.f32 %v422, 0.0
    %v665 = vmax.f32 %v425, 0.0
    %v666 = vmax.f32 %v430, 0.0
    %v667 = vmax.f32 %v433, 0.0
    %v668 = vmax.f32 %v438, 0.0
    %v669 = vmax.f32 %v441, 0.0
    %v670 = vmax.f32 %v446, 0.0
    %v671 = vmax.f32 %v449, 0.0
    %v672 = vmax.f32 %v454, 0.0
    %v673 = vmax.f32 %v457, 0.0
    %v674 = vmax.f32 %v462, 0.0
    %v675 = vmax.f32 %v465, 0.0
    %v676 = vmax.f32 %v470, 0.0
    %v677 = vmax.f32 %v473, 0.0
    %v678 = vmax.f32 %v478, 0.0
    %v679 = vmax.f32 %v481, 0.0
    %v680 = vmax.f32 %v486, 0.0
    %v681 = vmax.f32 %v489, 0.0
    %v682 = vmax.f32 %v494, 0.0
    %v683 = vmax.f32 %v497, 0.0
    %v684 = vmax.f32 %v502, 0.0
    %v685 = vmax.f32 %v505, 0.0
    %v686 = vmax.f32 %v510, 0.0
    %v687 = vmax.f32 %v513, 0.0
    %v688 = vmax.f32 %v518, 0.0
    %v689 = vmax.f32 %v521, 0.0
    %v690 = vmax.f32 %v526, 0.0
    %v691 = vmax.f32 %v529, 0.0
    %v692 = vmax.f32 %v534, 0.0
    %v693 = vmax.f32 %v537, 0.0
    %v694 = vmax.f32 %v542, 0.0
    %v695 = vmax.f32 %v545, 0.0
    %v696 = vmax.f32 %v550, 0.0
    %v697 = vmax.f32 %v553, 0.0
    %v698 = vmax.f32 %v558, 0.0
    %v699 = vmax.f32 %v561, 0.0
    %v700 = vmax.f32 %v566, 0.0
    %v701 = vmax.f32 %v569, 0.0
    %v702 = vmax.f32 %v574, 0.0
    %v703 = vmax.f32 %v577, 0.0
    %v704 = vmax.f32 %v582, 0.0
    %v705 = vmax.f32 %v585, 0.0
    %v706 = vmax.f32 %v590, 0.0
    %v707 = vmax.f32 %v593, 0.0
    %v708 = vmax.f32 %v598, 0.0
    %v709 = vmax.f32 %v601, 0.0
    %v710 = vmax.f32 %v606, 0.0
    %v711 = vmax.f32 %v609, 0.0
    %v712 = vmax.f32 %v614, 0.0
    %v713 = vmax.f32 %v617, 0.0
    %v714 = vmax.f32 %v622, 0.0
    %v715 = vmax.f32 %v625, 0.0
    %v716 = vmax.f32 %v630, 0.0
    %v717 = vmax.f32 %v633, 0.0
    %v718 = vmax.f32 %v638, 0.0
    %v719 = vmax.f32 %v641, 0.0
    %v720 = vmax.f32 %v646, 0.0
    %v721 = vmax.f32 %v649, 0.0
    %v722 = vmax.f32 %v654, 0.0
    %v723 = vmax.f32 %v657, 0.0
    %724 = vst [vmem:[#allocation7] sm:$0xff] %v660
    %725 = vst [vmem:[#allocation7 + $0x8] sm:$0xff] %v661
    %726 = vst [vmem:[#allocation7 + $0x10] sm:$0xff] %v662
    %727 = vst [vmem:[#allocation7 + $0x18] sm:$0xff] %v663
    %728 = vst [vmem:[#allocation7 + $0x20] sm:$0xff] %v664
    %729 = vst [vmem:[#allocation7 + $0x28] sm:$0xff] %v665
    %730 = vst [vmem:[#allocation7 + $0x30] sm:$0xff] %v666
    %731 = vst [vmem:[#allocation7 + $0x38] sm:$0xff] %v667
    %732 = vst [vmem:[#allocation7 + $0x40] sm:$0xff] %v668
    %733 = vst [vmem:[#allocation7 + $0x48] sm:$0xff] %v669
    %734 = vst [vmem:[#allocation7 + $0x50] sm:$0xff] %v670
    %735 = vst [vmem:[#allocation7 + $0x58] sm:$0xff] %v671
    %736 = vst [vmem:[#allocation7 + $0x60] sm:$0xff] %v672
    %737 = vst [vmem:[#allocation7 + $0x68] sm:$0xff] %v673
    %738 = vst [vmem:[#allocation7 + $0x70] sm:$0xff] %v674
    %739 = vst [vmem:[#allocation7 + $0x78] sm:$0xff] %v675
    %740 = vst [vmem:[#allocation7 + $0x80] sm:$0xff] %v676
    %741 = vst [vmem:[#allocation7 + $0x88] sm:$0xff] %v677
    %742 = vst [vmem:[#allocation7 + $0x90] sm:$0xff] %v678
    %743 = vst [vmem:[#allocation7 + $0x98] sm:$0xff] %v679
    %744 = vst [vmem:[#allocation7 + $0xa0] sm:$0xff] %v680
    %745 = vst [vmem:[#allocation7 + $0xa8] sm:$0xff] %v681
    %746 = vst [vmem:[#allocation7 + $0xb0] sm:$0xff] %v682
    %747 = vst [vmem:[#allocation7 + $0xb8] sm:$0xff] %v683
    %748 = vst [vmem:[#allocation7 + $0xc0] sm:$0xff] %v684
    %749 = vst [vmem:[#allocation7 + $0xc8] sm:$0xff] %v685
    %750 = vst [vmem:[#allocation7 + $0xd0] sm:$0xff] %v686
    %751 = vst [vmem:[#allocation7 + $0xd8] sm:$0xff] %v687
    %752 = vst [vmem:[#allocation7 + $0xe0] sm:$0xff] %v688
    %753 = vst [vmem:[#allocation7 + $0xe8] sm:$0xff] %v689
    %754 = vst [vmem:[#allocation7 + $0xf0] sm:$0xff] %v690
    %755 = vst [vmem:[#allocation7 + $0xf8] sm:$0xff] %v691
    %756 = vst [vmem:[#allocation7 + $0x100] sm:$0xff] %v692
    %757 = vst [vmem:[#allocation7 + $0x108] sm:$0xff] %v693
    %758 = vst [vmem:[#allocation7 + $0x110] sm:$0xff] %v694
    %759 = vst [vmem:[#allocation7 + $0x118] sm:$0xff] %v695
    %760 = vst [vmem:[#allocation7 + $0x120] sm:$0xff] %v696
    %761 = vst [vmem:[#allocation7 + $0x128] sm:$0xff] %v697
    %762 = vst [vmem:[#allocation7 + $0x130] sm:$0xff] %v698
    %763 = vst [vmem:[#allocation7 + $0x138] sm:$0xff] %v699
    %764 = vst [vmem:[#allocation7 + $0x140] sm:$0xff] %v700
    %765 = vst [vmem:[#allocation7 + $0x148] sm:$0xff] %v701
    %766 = vst [vmem:[#allocation7 + $0x150] sm:$0xff] %v702
    %767 = vst [vmem:[#allocation7 + $0x158] sm:$0xff] %v703
    %768 = vst [vmem:[#allocation7 + $0x160] sm:$0xff] %v704
    %769 = vst [vmem:[#allocation7 + $0x168] sm:$0xff] %v705
    %770 = vst [vmem:[#allocation7 + $0x170] sm:$0xff] %v706
    %771 = vst [vmem:[#allocation7 + $0x178] sm:$0xff] %v707
    %772 = vst [vmem:[#allocation7 + $0x180] sm:$0xff] %v708
    %773 = vst [vmem:[#allocation7 + $0x188] sm:$0xff] %v709
    %774 = vst [vmem:[#allocation7 + $0x190] sm:$0xff] %v710
    %775 = vst [vmem:[#allocation7 + $0x198] sm:$0xff] %v711
    %776 = vst [vmem:[#allocation7 + $0x1a0] sm:$0xff] %v712
    %777 = vst [vmem:[#allocation7 + $0x1a8] sm:$0xff] %v713
    %778 = vst [vmem:[#allocation7 + $0x1b0] sm:$0xff] %v714
    %779 = vst [vmem:[#allocation7 + $0x1b8] sm:$0xff] %v715
    %780 = vst [vmem:[#allocation7 + $0x1c0] sm:$0xff] %v716
    %781 = vst [vmem:[#allocation7 + $0x1c8] sm:$0xff] %v717
    %782 = vst [vmem:[#allocation7 + $0x1d0] sm:$0xff] %v718
    %783 = vst [vmem:[#allocation7 + $0x1d8] sm:$0xff] %v719
    %784 = vst [vmem:[#allocation7 + $0x1e0] sm:$0xff] %v720
    %785 = vst [vmem:[#allocation7 + $0x1e8] sm:$0xff] %v721
    %786 = vst [vmem:[#allocation7 + $0x1f0] sm:$0xff] %v722
    %787 = vst [vmem:[#allocation7 + $0x1f8] sm:$0xff] %v723
    // Predicated region
    $region22: #{tpu_custom_call.1} parent=1 // pred_check
      _
    $region23: #{tpu_custom_call.1} parent=1 // pred_check_branch
      %789 = sbr.rel (0) target = $region25
    $region24: #{tpu_custom_call.1} parent=1 // pred_region
      %s791 = ssub.s32 8192, 8192
      %792 = vsyncadd [#allocation4], %s791
      %s793 = sshll.u32 [#allocation7], 4
      %s794 = int_to_ptr.vmem [resolvable:$true] %s793
      %799 = dma.vmem_to_hbm [thread:$0]  %s794, 8192, %s3, [#allocation4], 128, 128, 8
    $region25: #{tpu_custom_call.1} parent=1 // pred_fallthru
      _
    // Predicated region
    $region26: #{tpu_custom_call.1} parent=1 // pred_check
      _
    $region27: #{tpu_custom_call.1} parent=1 // pred_check_branch
      %801 = sbr.rel (0) target = $region29
    $region28: #{tpu_custom_call.1} parent=1 // pred_region
      %802 = dma.done [#allocation4], 8192
    $region29: #{tpu_custom_call.1} parent=1 // pred_fallthru
      _
    %803 = vsyncpa [#allocation3], 1
    %804 = vsyncpa [#allocation6], 1
    %805 = vsyncpa [#allocation4], 1

</llo_original>
